<compile_context>
chip_gen: v7x
topology: tpu7x:2x2x1
jax: 0.10.0
libtpu: 0.0.40
codegen_flags: <defaults>
</compile_context>

<pallas_src>
import jax
import jax.numpy as jnp
from jax.experimental import pallas as pl
from jax.experimental.pallas import tpu as pltpu


_EPS = 1e-5
_LANE = 128
_SUBLANE = 8
# Cap the row tile so the (tm, 2) f32 param block (lane-padded to 128 in VMEM,
# i.e. tm * 512 B per buffer) stays a small fraction of the VMEM budget.
_MAX_TM = 4096


def _round_down(v, m):
    return (v // m) * m


def _round_up(v, m):
    return ((v + m - 1) // m) * m


def _vmem_config():
    """(per-buffer tile byte target, vmem_limit_bytes), generation-aware."""
    # Conservative fallback is v7x-safe (64 MiB physical VMEM).
    tile_target, vmem_limit = 5 * 1024 * 1024, 44 * 1024 * 1024
    try:
        cap = int(getattr(pltpu.get_tpu_info(), "vmem_capacity_bytes", 0))
        if cap >= 100 * 1024 * 1024:  # v5e / v6e: 128 MiB physical VMEM
            tile_target, vmem_limit = 12 * 1024 * 1024, 96 * 1024 * 1024
    except Exception:
        pass
    return tile_target, vmem_limit


def _pick_tiles(rows, cols, itemsize, tile_target):
    """Pick (tm, tn): tm multiple of the packed-sublane unit (or == rows),
    tn multiple of 128 (or == cols); per-buffer x tile ~= tile_target."""
    sub = max(_SUBLANE, (_SUBLANE * 4) // max(1, itemsize))  # 8 f32 / 16 bf16 / 32 i8
    min_tm = rows if rows < sub else sub

    if min_tm * cols * itemsize > tile_target:
        # Even one minimal row-slab exceeds the budget (huge H*W): tile lanes too.
        tm = min_tm
        tn = max(_LANE, _round_down(tile_target // max(1, tm * itemsize), _LANE))
        if tn >= cols:
            tn = cols
    else:
        tn = cols  # full-width, lane-dense
        tm = tile_target // max(1, cols * itemsize)
        tm = min(tm, rows, _MAX_TM)
        tm = rows if tm >= rows else max(sub, _round_down(tm, sub))

    # Guarantee >= 2 grid steps whenever splittable so v7x's second TensorCore
    # always has work; costs at most one extra ~0.35 us step on 1-TC chips.
    if pl.cdiv(rows, tm) * pl.cdiv(cols, tn) < 2:
        if rows >= 2 * sub:
            tm_half = max(sub, _round_up(pl.cdiv(rows, 2), sub))
            if tm_half < rows:
                tm = tm_half
        elif cols >= 2 * _LANE:
            tn_half = max(_LANE, _round_up(pl.cdiv(cols, 2), _LANE))
            if tn_half < cols:
                tn = tn_half
    return tm, tn


def _bn_rows_kernel(x_ref, p_ref, o_ref):
    # x/o: (tm, tn); p: (tm, 2) f32 -> col 0 = scale, col 1 = bias (broadcast over lanes).
    p = p_ref[...]
    o_ref[...] = (x_ref[...] * p[:, 0:1] + p[:, 1:2]).astype(o_ref.dtype)


def _bn_cols_kernel(x_ref, p_ref, o_ref):
    # x/o: (tm, tn); p: (2, tn) f32 -> row 0 = scale, row 1 = bias (broadcast over sublanes).
    p = p_ref[...]
    o_ref[...] = (x_ref[...] * p[0:1, :] + p[1:2, :]).astype(o_ref.dtype)


def _fused_affine(weight, bias, running_mean, running_var, eps):
    scale = weight.astype(jnp.float32) * jax.lax.rsqrt(
        running_var.astype(jnp.float32) + jnp.float32(eps))
    shift = bias.astype(jnp.float32) - running_mean.astype(jnp.float32) * scale
    return scale, shift


def frozen_batch_norm_2d(x, weight, bias, running_mean, running_var,
                         eps=_EPS, block_rows=None, block_cols=None):
    """Torchvision-style FrozenBatchNorm2d forward. x: (N, C, H, W); params: (C,)."""
    N, C, H, W = x.shape
    rows, hw = N * C, H * W
    itemsize = jnp.dtype(x.dtype).itemsize

    scale_c, bias_c = _fused_affine(weight, bias, running_mean, running_var, eps)

    # Packed per-row params (rows, 2): one input, one DMA descriptor, and the
    # block is resident across the inner (lane) grid axis.
    params = jnp.stack(
        [jnp.broadcast_to(scale_c[None, :], (N, C)).reshape(-1),
         jnp.broadcast_to(bias_c[None, :], (N, C)).reshape(-1)],
        axis=-1,
    )

    x2d = x.reshape(rows, hw)

    tile_target, vmem_limit = _vmem_config()
    tm, tn = _pick_tiles(rows, hw, itemsize, tile_target)
    if block_rows is not None:
        tm = min(block_rows, rows)
    if block_cols is not None:
        tn = min(block_cols, hw)

    grid = (pl.cdiv(rows, tm), pl.cdiv(hw, tn))

    cost = pl.CostEstimate(
        flops=2 * rows * hw,
        transcendentals=0,
        bytes_accessed=2 * rows * hw * itemsize + rows * 2 * 4,
    )

    out2d = pl.pallas_call(
        _bn_rows_kernel,
        out_shape=jax.ShapeDtypeStruct((rows, hw), x.dtype),
        grid_spec=pltpu.PrefetchScalarGridSpec(
            num_scalar_prefetch=0,
            grid=grid,
            in_specs=[
                pl.BlockSpec((tm, tn), lambda i, j: (i, j)),  # x tile
                pl.BlockSpec((tm, 2), lambda i, j: (i, 0)),   # packed scale/bias (resident in j)
            ],
            out_specs=pl.BlockSpec((tm, tn), lambda i, j: (i, j)),
        ),
        compiler_params=pltpu.CompilerParams(
            dimension_semantics=("parallel", "parallel"),
            vmem_limit_bytes=vmem_limit,
        ),
        cost_estimate=cost,
    )(x2d, params)

    return out2d.reshape(N, C, H, W)


def frozen_batch_norm_2d_nhwc(x, weight, bias, running_mean, running_var,
                              eps=_EPS, block_rows=None, block_cols=None):
    """Channels-last variant for callers whose data is already NHWC.
    Lane-dense output when C % 128 == 0; params are a single resident (2, C) pair."""
    N, H, W, C = x.shape
    rows = N * H * W
    itemsize = jnp.dtype(x.dtype).itemsize

    scale_c, bias_c = _fused_affine(weight, bias, running_mean, running_var, eps)
    params = jnp.stack([scale_c, bias_c], axis=0)  # (2, C) f32

    x2d = x.reshape(rows, C)

    tile_target, vmem_limit = _vmem_config()
    tm, tn = _pick_tiles(rows, C, itemsize, tile_target)
    if block_rows is not None:
        tm = min(block_rows, rows)
    if block_cols is not None:
        tn = min(block_cols, C)

    grid = (pl.cdiv(rows, tm), pl.cdiv(C, tn))

    cost = pl.CostEstimate(
        flops=2 * rows * C,
        transcendentals=0,
        bytes_accessed=2 * rows * C * itemsize + 2 * C * 4,
    )

    out2d = pl.pallas_call(
        _bn_cols_kernel,
        out_shape=jax.ShapeDtypeStruct((rows, C), x.dtype),
        grid_spec=pltpu.PrefetchScalarGridSpec(
            num_scalar_prefetch=0,
            grid=grid,
            in_specs=[
                pl.BlockSpec((tm, tn), lambda i, j: (i, j)),  # x tile
                pl.BlockSpec((2, tn), lambda i, j: (0, j)),   # packed scale/bias row pair
            ],
            out_specs=pl.BlockSpec((tm, tn), lambda i, j: (i, j)),
        ),
        compiler_params=pltpu.CompilerParams(
            dimension_semantics=("parallel", "parallel"),
            vmem_limit_bytes=vmem_limit,
        ),
        cost_estimate=cost,
    )(x2d, params)

    return out2d.reshape(N, H, W, C)


def _reference_nchw(x, weight, bias, running_mean, running_var, eps=_EPS):
    C = x.shape[1]
    scale = weight * jax.lax.rsqrt(running_var + eps)
    shift = bias - running_mean * scale
    return x * scale.reshape(1, C, 1, 1) + shift.reshape(1, C, 1, 1)


if __name__ == "__main__":
    key = jax.random.PRNGKey(0)

    def make_params(k, C):
        kw, kb, km, kv = jax.random.split(k, 4)
        w = jnp.ones((C,), jnp.float32) + 0.1 * jax.random.normal(kw, (C,), jnp.float32)
        b = 0.1 * jax.random.normal(kb, (C,), jnp.float32)
        rm = 0.1 * jax.random.normal(km, (C,), jnp.float32)
        rv = jnp.ones((C,), jnp.float32) + 0.1 * jnp.abs(
            jax.random.normal(kv, (C,), jnp.float32))
        return w, b, rm, rv

    k1, k2, k3, k4 = jax.random.split(key, 4)

    # 1) Canonical small NCHW shape (>=2 grid steps guaranteed by the tiler).
    N, C, H, W = 2, 4, 16, 16
    x = jax.random.normal(k1, (N, C, H, W), dtype=jnp.float32)
    w, b, rm, rv = make_params(k2, C)
    out = jax.block_until_ready(frozen_batch_norm_2d(x, w, b, rm, rv))
    ref = _reference_nchw(x, w, b, rm, rv)
    assert out.shape == x.shape and out.dtype == x.dtype
    assert jnp.allclose(out, ref, atol=1e-5, rtol=1e-5), float(jnp.max(jnp.abs(out - ref)))

    # 2) Partial blocks on both axes: rows % tm != 0 and hw % 128 != 0 (14x14 maps).
    N2, C2, H2, W2 = 2, 20, 14, 14               # rows=40, hw=196
    x2 = jax.random.normal(k3, (N2, C2, H2, W2), dtype=jnp.float32)
    w2, b2, rm2, rv2 = make_params(k4, C2)
    out2 = jax.block_until_ready(
        frozen_batch_norm_2d(x2, w2, b2, rm2, rv2, block_rows=16, block_cols=128))
    ref2 = _reference_nchw(x2, w2, b2, rm2, rv2)
    assert jnp.allclose(out2, ref2, atol=1e-5, rtol=1e-5), float(jnp.max(jnp.abs(out2 - ref2)))

    # 3) bf16 activations (packed-sublane tile alignment path).
    k5, k6 = jax.random.split(jax.random.PRNGKey(1), 2)
    x3 = jax.random.normal(k5, (2, 8, 16, 16), dtype=jnp.float32).astype(jnp.bfloat16)
    w3, b3, rm3, rv3 = make_params(k6, 8)
    out3 = jax.block_until_ready(frozen_batch_norm_2d(x3, w3, b3, rm3, rv3))
    ref3 = _reference_nchw(x3.astype(jnp.float32), w3, b3, rm3, rv3)
    assert out3.dtype == jnp.bfloat16
    assert jnp.allclose(out3.astype(jnp.float32), ref3, atol=5e-2, rtol=5e-2)

    # 4) Channels-last path (lane-dense output, C % 128 == 0, no transpose inserted).
    k7, k8 = jax.random.split(jax.random.PRNGKey(2), 2)
    xn = jax.random.normal(k7, (2, 8, 8, 128), dtype=jnp.float32)
    wn, bn, rmn, rvn = make_params(k8, 128)
    outn = jax.block_until_ready(frozen_batch_norm_2d_nhwc(xn, wn, bn, rmn, rvn))
    scale_n = wn * jax.lax.rsqrt(rvn + _EPS)
    refn = xn * scale_n.reshape(1, 1, 1, -1) + (bn - rmn * scale_n).reshape(1, 1, 1, -1)
    assert outn.shape == xn.shape and outn.dtype == xn.dtype
    assert jnp.allclose(outn, refn, atol=1e-5, rtol=1e-5)

    print("KERNEL_OK")
</pallas_src>

<mosaic_0001>
module attributes {stable_mosaic.version = 11 : i64} {
  func.func @_bn_rows_kernel(%arg0: i32, %arg1: i32, %arg2: memref<8x128xf32, #tpu.memory_space<vmem>>, %arg3: memref<8x2xf32, #tpu.memory_space<vmem>>, %arg4: memref<8x128xf32, #tpu.memory_space<vmem>>) attributes {dimension_semantics = [#tpu.dimension_semantics<parallel>, #tpu.dimension_semantics<parallel>], iteration_bounds = array<i64: 1, 2>, scalar_prefetch = 0 : i64, scratch_operands = 0 : i64, tpu.core_type = #tpu.core_type<tc>, window_params = [{transform_indices = @transform_0, window_bounds = array<i64: 8, 128>}, {transform_indices = @transform_1, window_bounds = array<i64: 8, 2>}, {transform_indices = @transform_2, window_bounds = array<i64: 8, 128>}]} {
    %c0 = arith.constant 0 : index
    %c0_0 = arith.constant 0 : index
    %0 = vector.load %arg3[%c0, %c0_0] : memref<8x2xf32, #tpu.memory_space<vmem>>, vector<8x2xf32>
    %c0_1 = arith.constant 0 : index
    %c0_2 = arith.constant 0 : index
    %1 = vector.load %arg2[%c0_1, %c0_2] : memref<8x128xf32, #tpu.memory_space<vmem>>, vector<8x128xf32>
    %2 = vector.extract_strided_slice %0 {offsets = [0, 0], sizes = [8, 1], strides = [1, 1]} : vector<8x2xf32> to vector<8x1xf32>
    %3 = vector.broadcast %2 : vector<8x1xf32> to vector<8x128xf32>
    %4 = arith.mulf %1, %3 : vector<8x128xf32>
    %5 = vector.extract_strided_slice %0 {offsets = [0, 1], sizes = [8, 1], strides = [1, 1]} : vector<8x2xf32> to vector<8x1xf32>
    %6 = vector.broadcast %5 : vector<8x1xf32> to vector<8x128xf32>
    %7 = arith.addf %4, %6 : vector<8x128xf32>
    %c0_3 = arith.constant 0 : index
    %c0_4 = arith.constant 0 : index
    %8 = vector.load %arg4[%c0_3, %c0_4] : memref<8x128xf32, #tpu.memory_space<vmem>>, vector<8x128xf32>
    tpu.vector_store %arg4[%c0_3, %c0_4], %7 {strides = array<i32>} : memref<8x128xf32, #tpu.memory_space<vmem>>, vector<8x128xf32>,
    return
  }
  func.func @transform_0(%arg0: i32, %arg1: i32) -> (i32, i32) {
    %c0_i32 = arith.constant 0 : i32
    return %arg0, %arg1 : i32, i32
  }
  func.func @transform_1(%arg0: i32, %arg1: i32) -> (i32, i32) {
    %c0_i32 = arith.constant 0 : i32
    %c0_i32_0 = arith.constant 0 : i32
    return %arg0, %c0_i32 : i32, i32
  }
  func.func @transform_2(%arg0: i32, %arg1: i32) -> (i32, i32) {
    %c0_i32 = arith.constant 0 : i32
    return %arg0, %arg1 : i32, i32
  }
}

</mosaic_0001>

<llo_original>
// kernel: tpu_custom_call.1
$region0: #{tpu_custom_call.1}
  #allocation0 [shape = 'u32[]', space=smem, size = 0x4, offset = 0x4, fixed_abs, tag = 'smem constant byte address 0x4 - core index']
  #allocation1 [shape = 'u32[144,128]{1,0:T(1,128)}', space=vmem, size = 0x12000, scoped, tag = 'internal scratch']
  %s0 = inlined_call_operand.hbm [shape: f32[8,256], index: 0, kind: input, shape index: {}]
  %s1 = inlined_call_operand.vmem [shape: f32[8,2], index: 1, kind: input, shape index: {}]
  %s2 = inlined_call_operand.hbm [shape: f32[8,256], index: 2, kind: output, shape index: {}]
  %s3 = sld [smem:[#allocation0]]
  $region45: #{tpu_custom_call.1} parent=0
    _
  %s5 = ssub.s32 1, %s3
  %s6 = scalar_select 0, %s5, %s3
  $region1: #{tpu_custom_call.1} parent=0
    #allocation2 [shape = 'u8[8192]{0}', space=vmem, size = 0x2000, scoped, tag = 'input window, operand 0']
    #allocation3 [shape = 's32[2]{0}', space=sflag, size = 0x8, scoped, tag = 'scoped memory for tpu_custom_call.1']
    #allocation4 [shape = 's32[2]{0}', space=sflag, size = 0x8, scoped, tag = 'scoped memory for tpu_custom_call.1']
    #allocation5 [shape = 'u8[8192]{0}', space=vmem, size = 0x2000, scoped, tag = 'output window, operand 0']
    %7 = vsyncpa [#allocation3], 0
    %s8 = scalar_lea.sflag [#allocation3], 1
    %9 = vsyncpa %s8, 0
    %10 = vsyncpa [#allocation4], 0
    %s11 = scalar_lea.sflag [#allocation4], 1
    %12 = vsyncpa %s11, 0
    loop: start=0, step=1, limit=4
    $region2: #{tpu_custom_call.1} parent=1 // loop_pre_header
      _
    $region3: #{tpu_custom_call.1} parent=1 // loop_header
      %s14 = sphi 0, %s18
      %p15 = scmp.ge.s32.totalorder %s14, 4
      %s21 = sphi 0, %s33
      %s22 = sphi 0, %s29
      %s23 = sphi 0, %s21
      %s24 = sphi 0, %s22
      %s25 = sphi 0, %s23
      %s26 = sphi 0, %s24
      %s38 = sphi 0, %s40
      %s41 = sphi 0, %s38
      %s42 = sphi 0, %s41
      %s58 = sphi 0, %s42
      %s64 = sphi 0, %s66
      %s67 = sphi 0, %s64
      %s68 = sphi 0, %s67
      %s84 = sphi 0, %s68
      %s92 = sphi 0, %s94
      %s95 = sphi 0, %s92
      %s96 = sphi 0, %s95
      %s112 = sphi 0, %s96
    $region4: #{tpu_custom_call.1} parent=1 // loop_header_branch
      %17 = sbr.rel (%p15) target = $region8
    $region5: #{tpu_custom_call.1} parent=1 // loop_body
      %s19 = ssub.s32 %s14, 1
      %s20 = ssub.s32 %s14, 2
      %s27 = sadd.s32 1, %s22
      %p28 = scmp.ge.s32.totalorder %s27, 2
      %s29 = scalar_select %p28, 0, %s27
      %s30 = sadd.s32 1, %s21
      %s31 = scalar_select %p28, %s30, %s21
      %p32 = scmp.ge.s32.totalorder %s31, 1
      %s33 = scalar_select %p32, 0, %s31
      %s34 = ssub.s32 %s21, %s33
      %s35 = ssub.s32 %s22, %s29
      %s36 = sor.u32 %s34, %s35
      %p37 = scmp.eq.s32.totalorder %s36, 0
      %s39 = sadd.s32 %s38, 1
      %s40 = scalar_select %p37, %s38, %s39
      %p43 = pneg %p37
      %p44 = scmp.eq.s32.totalorder %s14, 1
      %p45 = por %p43, %p44
      %p46 = scmp.ne.s32.totalorder %s38, %s41
      %p47 = scmp.eq.s32.totalorder %s14, 0
      %p48 = por %p46, %p47
      %p49 = scmp.ne.s32.totalorder %s38, %s41
      %p50 = scmp.eq.s32.totalorder %s19, 1
      %p51 = por %p49, %p50
      %p52 = scmp.ne.s32.totalorder %s41, %s42
      %p53 = scmp.eq.s32.totalorder %s19, 0
      %p54 = por %p52, %p53
      %p55 = scmp.ne.s32.totalorder %s41, %s42
      %p56 = scmp.eq.s32.totalorder %s20, 1
      %p57 = por %p55, %p56
      %p59 = scmp.ne.s32.totalorder %s42, %s58
      %p60 = scmp.eq.s32.totalorder %s20, 0
      %p61 = por %p59, %p60
      %s62 = ssub.s32 %s21, %s33
      %p63 = scmp.eq.s32.totalorder %s62, 0
      %s65 = sadd.s32 %s64, 1
      %s66 = scalar_select %p63, %s64, %s65
      %p69 = pneg %p63
      %p70 = scmp.eq.s32.totalorder %s14, 1
      %p71 = por %p69, %p70
      %p72 = scmp.ne.s32.totalorder %s64, %s67
      %p73 = scmp.eq.s32.totalorder %s14, 0
      %p74 = por %p72, %p73
      %p75 = scmp.ne.s32.totalorder %s64, %s67
      %p76 = scmp.eq.s32.totalorder %s19, 1
      %p77 = por %p75, %p76
      %p78 = scmp.ne.s32.totalorder %s67, %s68
      %p79 = scmp.eq.s32.totalorder %s19, 0
      %p80 = por %p78, %p79
      %p81 = scmp.ne.s32.totalorder %s67, %s68
      %p82 = scmp.eq.s32.totalorder %s20, 1
      %p83 = por %p81, %p82
      %p85 = scmp.ne.s32.totalorder %s68, %s84
      %p86 = scmp.eq.s32.totalorder %s20, 0
      %p87 = por %p85, %p86
      %s88 = ssub.s32 %s21, %s33
      %s89 = ssub.s32 %s22, %s29
      %s90 = sor.u32 %s88, %s89
      %p91 = scmp.eq.s32.totalorder %s90, 0
      %s93 = sadd.s32 %s92, 1
      %s94 = scalar_select %p91, %s92, %s93
      %p97 = pneg %p91
      %p98 = scmp.eq.s32.totalorder %s14, 1
      %p99 = por %p97, %p98
      %p100 = scmp.ne.s32.totalorder %s92, %s95
      %p101 = scmp.eq.s32.totalorder %s14, 0
      %p102 = por %p100, %p101
      %p103 = scmp.ne.s32.totalorder %s92, %s95
      %p104 = scmp.eq.s32.totalorder %s19, 1
      %p105 = por %p103, %p104
      %p106 = scmp.ne.s32.totalorder %s95, %s96
      %p107 = scmp.eq.s32.totalorder %s19, 0
      %p108 = por %p106, %p107
      %p109 = scmp.ne.s32.totalorder %s95, %s96
      %p110 = scmp.eq.s32.totalorder %s20, 1
      %p111 = por %p109, %p110
      %p113 = scmp.ne.s32.totalorder %s96, %s112
      %p114 = scmp.eq.s32.totalorder %s20, 0
      %p115 = por %p113, %p114
      %p116 = scmp.le.s32.totalorder 1, %s14
      %p117 = scmp.lt.s32.totalorder %s14, 3
      %p118 = pnand %p116, %p117
      %p119 = pneg %p118
      // Predicated region
      $region9: #{tpu_custom_call.1} parent=5 // pred_check
        _
      $region10: #{tpu_custom_call.1} parent=5 // pred_check_branch
        %121 = sbr.rel (%p118) target = $region12
      $region11: #{tpu_custom_call.1} parent=5 // pred_region
        %s122 = ssub.s32 %s14, 1
        // Predicated region
        $region13: #{tpu_custom_call.1} parent=11 // pred_check
          %p123 = pneg %p80
        $region14: #{tpu_custom_call.1} parent=11 // pred_check_branch
          %125 = sbr.rel (%p123) target = $region16
        $region15: #{tpu_custom_call.1} parent=11 // pred_region
          %p126 = scmp.lt.s32.totalorder %s23, 0
          %s127 = scalar_select %p126, %s23, 0
          %s128 = smul.addr %s127, 8
          %s129 = scalar_lea.vmem %s1, %s128
        $region16: #{tpu_custom_call.1} parent=11 // pred_fallthru
          _
      $region12: #{tpu_custom_call.1} parent=5 // pred_fallthru
        _
      %p130 = scmp.lt.s32.totalorder %s14, 2
      // Predicated region
      $region17: #{tpu_custom_call.1} parent=5 // pred_check
        %p131 = pneg %p130
      $region18: #{tpu_custom_call.1} parent=5 // pred_check_branch
        %133 = sbr.rel (%p131) target = $region20
      $region19: #{tpu_custom_call.1} parent=5 // pred_region
        // Predicated region
        $region21: #{tpu_custom_call.1} parent=19 // pred_check
          %p134 = pneg %p48
        $region22: #{tpu_custom_call.1} parent=19 // pred_check_branch
          %136 = sbr.rel (%p134) target = $region24
        $region23: #{tpu_custom_call.1} parent=19 // pred_region
          %s137 = sand.u32 %s38, 1
          %s138 = scalar_lea.sflag [#allocation3], %s137
          %s139 = sand.u32 %s38, 1
          %s140 = smul.addr %s139, 8
          %s141 = scalar_lea.vmem [#allocation2], %s140
          %s143 = ssub.s32 128, 128
          %144 = vsyncadd %s138, %s143
          %s145 = smul.addr %s21, 2
          %s146 = sadd.s32 %s22, %s145
          %s147 = smul.addr %s146, 128
          %s148 = scalar_lea.hbm %s0, %s147
          %s150 = sshll.u32 %s141, 4
          %s151 = int_to_ptr.vmem [resolvable:$true] %s150
          %153 = dma.hbm_to_vmem [thread:$0]  %s148, 128, %s151, %s138
        $region24: #{tpu_custom_call.1} parent=19 // pred_fallthru
          _
      $region20: #{tpu_custom_call.1} parent=5 // pred_fallthru
        _
      %p154 = scmp.le.s32.totalorder 1, %s14
      %p155 = scmp.lt.s32.totalorder %s14, 3
      %p156 = pnand %p154, %p155
      %p157 = pneg %p156
      // Predicated region
      $region25: #{tpu_custom_call.1} parent=5 // pred_check
        _
      $region26: #{tpu_custom_call.1} parent=5 // pred_check_branch
        %159 = sbr.rel (%p156) target = $region28
      $region27: #{tpu_custom_call.1} parent=5 // pred_region
        %s160 = ssub.s32 %s14, 1
        %s161 = sand.u32 %s41, 1
        %s162 = scalar_lea.sflag [#allocation3], %s161
        %s163 = sand.u32 %s41, 1
        %s164 = smul.addr %s163, 8
        %s165 = scalar_lea.vmem [#allocation2], %s164
        // Predicated region
        $region29: #{tpu_custom_call.1} parent=27 // pred_check
          %p166 = pneg %p54
        $region30: #{tpu_custom_call.1} parent=27 // pred_check_branch
          %168 = sbr.rel (%p166) target = $region32
        $region31: #{tpu_custom_call.1} parent=27 // pred_region
          %169 = dma.done %s162, 128
        $region32: #{tpu_custom_call.1} parent=27 // pred_fallthru
          _
        %s170 = sand.u32 %s41, 1
        %s171 = scalar_lea.sflag [#allocation3], %s170
        %s172 = sand.u32 %s41, 1
        %s173 = smul.addr %s172, 8
        %s174 = scalar_lea.vmem [#allocation2], %s173
        %p175 = pneg %p54
        %p176 = pneg %p51
        %p177 = scmp.lt.s32.totalorder %s23, 0
        %s178 = scalar_select %p177, %s23, 0
        %s179 = smul.addr %s178, 8
        %s180 = scalar_lea.vmem %s1, %s179
        %p181 = pneg %p80
        %p182 = pneg %p77
        %p183 = pneg %p108
        %p184 = pneg %p105
        %s185 = sand.u32 %s95, 1
        %s186 = scalar_lea.sflag [#allocation4], %s185
        %s187 = sand.u32 %s95, 1
        %s188 = smul.addr %s187, 8
        %s189 = scalar_lea.vmem [#allocation5], %s188
        %p190 = scmp.lt.s32.totalorder %s23, 0
        %s191 = scalar_select %p190, %s23, 0
        %s192 = smul.addr %s191, 8
        %s193 = scalar_lea.vmem %s1, %s192
        %v194 = vld [vmem:[%s193] sm:$0xff]
        %v195 = vld [vmem:[%s165] sm:$0xff]
        %197 = vset.pattern.permute.xlu0 0
        %198 = vperm.xlu0 %197, %v194
        %v199 = vpop.permute.xlu0 %198
        %v201 = vmul.f32 %v195, %v199
        %202 = vset.pattern.permute.xlu0 1
        %203 = vperm.xlu0 %202, %v194
        %v204 = vpop.permute.xlu0 %203
        %v206 = vadd.f32 %v201, %v204
        %207 = vst [vmem:[%s189] sm:$0xff] %v206
        %s208 = sand.u32 %s95, 1
        %s209 = scalar_lea.sflag [#allocation4], %s208
        %s210 = sand.u32 %s95, 1
        %s211 = smul.addr %s210, 8
        %s212 = scalar_lea.vmem [#allocation5], %s211
        // Predicated region
        $region33: #{tpu_custom_call.1} parent=27 // pred_check
          %p213 = pneg %p105
        $region34: #{tpu_custom_call.1} parent=27 // pred_check_branch
          %215 = sbr.rel (%p213) target = $region36
        $region35: #{tpu_custom_call.1} parent=27 // pred_region
          %s217 = ssub.s32 128, 128
          %218 = vsyncadd %s209, %s217
          %s219 = smul.addr %s23, 2
          %s220 = sadd.s32 %s24, %s219
          %s221 = smul.addr %s220, 128
          %s222 = scalar_lea.hbm %s2, %s221
          %s224 = sshll.u32 %s212, 4
          %s225 = int_to_ptr.vmem [resolvable:$true] %s224
          %227 = dma.vmem_to_hbm [thread:$0]  %s225, 128, %s222, %s209
        $region36: #{tpu_custom_call.1} parent=27 // pred_fallthru
          _
      $region28: #{tpu_custom_call.1} parent=5 // pred_fallthru
        _
      %p228 = scmp.le.s32.totalorder 2, %s14
      // Predicated region
      $region37: #{tpu_custom_call.1} parent=5 // pred_check
        %p229 = pneg %p228
      $region38: #{tpu_custom_call.1} parent=5 // pred_check_branch
        %231 = sbr.rel (%p229) target = $region40
      $region39: #{tpu_custom_call.1} parent=5 // pred_region
        %s232 = ssub.s32 %s14, 2
        // Predicated region
        $region41: #{tpu_custom_call.1} parent=39 // pred_check
          %p233 = pneg %p111
        $region42: #{tpu_custom_call.1} parent=39 // pred_check_branch
          %235 = sbr.rel (%p233) target = $region44
        $region43: #{tpu_custom_call.1} parent=39 // pred_region
          %s236 = sand.u32 %s96, 1
          %s237 = scalar_lea.sflag [#allocation4], %s236
          %s238 = sand.u32 %s96, 1
          %s239 = smul.addr %s238, 8
          %s240 = scalar_lea.vmem [#allocation5], %s239
          %241 = dma.done %s237, 128
        $region44: #{tpu_custom_call.1} parent=39 // pred_fallthru
          _
      $region40: #{tpu_custom_call.1} parent=5 // pred_fallthru
        _
    $region6: #{tpu_custom_call.1} parent=1 // loop_footer
      %s18 = sadd.s32 1, %s14
    $region7: #{tpu_custom_call.1} parent=1 // loop_footer_branch
      %13 = sbr.rel target = $region3
    $region8: #{tpu_custom_call.1} parent=1 // loop_exit
      _
    %242 = vsyncpa [#allocation3], 1
    %s243 = scalar_lea.sflag [#allocation3], 1
    %244 = vsyncpa %s243, 1
    %245 = vsyncpa [#allocation4], 1
    %s246 = scalar_lea.sflag [#allocation4], 1
    %247 = vsyncpa %s246, 1

</llo_original>
